<compile_context>
chip_gen: v5e
topology: v5e:2x2
jax: 0.10.0
libtpu: 0.0.40
codegen_flags: <defaults>
</compile_context>

<pallas_src>
import functools

import jax
import jax.numpy as jnp
from jax.experimental import pallas as pl
from jax.experimental.pallas import tpu as pltpu

E_HIDDEN = 300
R_HIDDEN = 100
DIM = 900


def _row_tile(m, cap=512):
    """Largest row tile: full array if small, else a multiple-of-8 cap."""
    return m if m <= cap else cap


# ----------------------------------------------------------------------------
# dense: x @ W^T + b   (weights pre-transposed once at init)
# ----------------------------------------------------------------------------
def _dense_kernel(x_ref, wt_ref, b_ref, o_ref):
    o_ref[...] = (
        jnp.dot(x_ref[...].astype(jnp.bfloat16),
                wt_ref[...].astype(jnp.bfloat16),
                preferred_element_type=jnp.float32)
        + b_ref[...]
    )


def dense(x, wt, b=None):
    x = x.astype(jnp.float32)
    M, K = x.shape
    N = wt.shape[1]
    if b is None:
        b = jnp.zeros((N,), jnp.float32)
    b2 = b.reshape(1, N).astype(jnp.float32)
    TM = _row_tile(M)
    return pl.pallas_call(
        _dense_kernel,
        out_shape=jax.ShapeDtypeStruct((M, N), jnp.float32),
        grid=(pl.cdiv(M, TM),),
        in_specs=[pl.BlockSpec((TM, K), lambda i: (i, 0)),
                  pl.BlockSpec((K, N), lambda i: (0, 0)),
                  pl.BlockSpec((1, N), lambda i: (0, 0))],
        out_specs=pl.BlockSpec((TM, N), lambda i: (i, 0)),
        compiler_params=pltpu.CompilerParams(dimension_semantics=("parallel",)),
    )(x, wt.astype(jnp.float32), b2)


# ----------------------------------------------------------------------------
# Highway: gate = leaky(x1 @ W^T + eps); out = leaky(gate*x2 + (1-gate)*x1)
# ----------------------------------------------------------------------------
def _highway_kernel(x1_ref, x2_ref, wt_ref, o_ref):
    x1 = x1_ref[...]
    gate = jnp.dot(x1.astype(jnp.bfloat16), wt_ref[...].astype(jnp.bfloat16),
                   preferred_element_type=jnp.float32) + 1e-08
    gate = jnp.where(gate >= 0, gate, 0.01 * gate)
    y = gate * x2_ref[...] + (1.0 - gate) * x1
    o_ref[...] = jnp.where(y >= 0, y, 0.01 * y)


def highway(wt, x1, x2):
    M, K = x1.shape
    TM = _row_tile(M)
    return pl.pallas_call(
        _highway_kernel,
        out_shape=jax.ShapeDtypeStruct((M, K), jnp.float32),
        grid=(pl.cdiv(M, TM),),
        in_specs=[pl.BlockSpec((TM, K), lambda i: (i, 0)),
                  pl.BlockSpec((TM, K), lambda i: (i, 0)),
                  pl.BlockSpec((K, K), lambda i: (0, 0))],
        out_specs=pl.BlockSpec((TM, K), lambda i: (i, 0)),
        compiler_params=pltpu.CompilerParams(dimension_semantics=("parallel",)),
    )(x1.astype(jnp.float32), x2.astype(jnp.float32), wt.astype(jnp.float32))


# ----------------------------------------------------------------------------
# Fused LSTM recurrence (per direction): gates / state kept in VMEM scratch
# ----------------------------------------------------------------------------
def _lstm_kernel(xg_ref, w_ref, b_ref, out_ref, h_sc, c_sc):
    T = xg_ref.shape[1]
    h_sc[...] = jnp.zeros(h_sc.shape, jnp.float32)
    c_sc[...] = jnp.zeros(c_sc.shape, jnp.float32)
    wg = [w_ref[g].astype(jnp.bfloat16) for g in range(4)]   # each (H, H) = W_g^T
    bg = [b_ref[g] for g in range(4)]                        # each (1, H)
    for t in range(T):                                       # T=3, unrolled
        hb = h_sc[...].astype(jnp.bfloat16)
        pre = [jnp.dot(hb, wg[g], preferred_element_type=jnp.float32)
               + xg_ref[g, t] + bg[g] for g in range(4)]
        i_g = jax.nn.sigmoid(pre[0])
        f_g = jax.nn.sigmoid(pre[1])
        g_g = jnp.tanh(pre[2])
        o_g = jax.nn.sigmoid(pre[3])
        c_sc[...] = f_g * c_sc[...] + i_g * g_g
        h_sc[...] = o_g * jnp.tanh(c_sc[...])
        out_ref[t] = h_sc[...]


def lstm_direction(p, x_seq, reverse=False):
    T, nb, inp = x_seq.shape
    H = p["whh_t4"].shape[-1]
    xs = x_seq[::-1] if reverse else x_seq
    # Input projection as one big matmul (bias b_ih folded in).
    xp = dense(xs.reshape(T * nb, inp), p["wih_t"], p["b_ih"])      # (T*nb, 4H)
    xg = jnp.transpose(xp.reshape(T, nb, 4, H), (2, 0, 1, 3))        # (4, T, nb, H)
    TNB = _row_tile(nb, cap=256)
    out = pl.pallas_call(
        _lstm_kernel,
        out_shape=jax.ShapeDtypeStruct((T, nb, H), jnp.float32),
        grid=(pl.cdiv(nb, TNB),),
        in_specs=[pl.BlockSpec((4, T, TNB, H), lambda i: (0, 0, i, 0)),
                  pl.BlockSpec((4, H, H), lambda i: (0, 0, 0)),
                  pl.BlockSpec((4, 1, H), lambda i: (0, 0, 0))],
        out_specs=pl.BlockSpec((T, TNB, H), lambda i: (0, i, 0)),
        scratch_shapes=[pltpu.VMEM((TNB, H), jnp.float32),
                        pltpu.VMEM((TNB, H), jnp.float32)],
        compiler_params=pltpu.CompilerParams(dimension_semantics=("parallel",)),
    )(xg, p["whh_t4"], p["bhh4"])
    return out[::-1] if reverse else out


def bilstm(p, x_seq):
    f = lstm_direction(p["fwd"], x_seq, reverse=False)
    b = lstm_direction(p["bwd"], x_seq, reverse=True)
    return jnp.concatenate([f, b], axis=-1)


def unilstm(p, x_seq):
    return lstm_direction(p, x_seq, reverse=False)


# ----------------------------------------------------------------------------
# GAT_E fused projection: x@Wh^T, x@Wt^T and the 4 score reductions
# ----------------------------------------------------------------------------
def _gate_proj_kernel(x_ref, wht_ref, wtt_ref, ah_ref, at_ref,
                      xrh_ref, xrt_ref, sc_ref):
    xb = x_ref[...].astype(jnp.bfloat16)
    xrh = jnp.dot(xb, wht_ref[...].astype(jnp.bfloat16),
                  preferred_element_type=jnp.float32)
    xrt = jnp.dot(xb, wtt_ref[...].astype(jnp.bfloat16),
                  preferred_element_type=jnp.float32)
    xrh_ref[...] = xrh
    xrt_ref[...] = xrt
    ah = ah_ref[...]    # rows: a_h1, a_t1  (applied to x_r_h)
    at = at_ref[...]    # rows: a_h2, a_t2  (applied to x_r_t)
    s0 = jnp.sum(xrh * ah[0:1, :], axis=-1, keepdims=True)
    s1 = jnp.sum(xrh * ah[1:2, :], axis=-1, keepdims=True)
    s2 = jnp.sum(xrt * at[0:1, :], axis=-1, keepdims=True)
    s3 = jnp.sum(xrt * at[1:2, :], axis=-1, keepdims=True)
    sc_ref[...] = jnp.concatenate([s0, s1, s2, s3], axis=-1)


def gat_e_proj(x_e, p):
    M, K = x_e.shape
    R = p["wht"].shape[1]
    TM = _row_tile(M)
    return pl.pallas_call(
        _gate_proj_kernel,
        out_shape=(jax.ShapeDtypeStruct((M, R), jnp.float32),
                   jax.ShapeDtypeStruct((M, R), jnp.float32),
                   jax.ShapeDtypeStruct((M, 4), jnp.float32)),
        grid=(pl.cdiv(M, TM),),
        in_specs=[pl.BlockSpec((TM, K), lambda i: (i, 0)),
                  pl.BlockSpec((K, R), lambda i: (0, 0)),
                  pl.BlockSpec((K, R), lambda i: (0, 0)),
                  pl.BlockSpec((2, R), lambda i: (0, 0)),
                  pl.BlockSpec((2, R), lambda i: (0, 0))],
        out_specs=(pl.BlockSpec((TM, R), lambda i: (i, 0)),
                   pl.BlockSpec((TM, R), lambda i: (i, 0)),
                   pl.BlockSpec((TM, 4), lambda i: (i, 0))),
        compiler_params=pltpu.CompilerParams(dimension_semantics=("parallel",)),
    )(x_e.astype(jnp.float32), p["wht"], p["wtt"], p["ah"], p["at"])


# ----------------------------------------------------------------------------
# Stacked 1-column score projections as VPU reductions
# ----------------------------------------------------------------------------
def _scores_kernel(x_ref, a_ref, o_ref):
    x = x_ref[...]
    a = a_ref[...]
    cols = [jnp.sum(x * a[j:j + 1, :], axis=-1, keepdims=True)
            for j in range(a.shape[0])]
    o_ref[...] = jnp.concatenate(cols, axis=-1)


def row_scores(x, a):
    M, K = x.shape
    k = a.shape[0]
    TM = _row_tile(M)
    return pl.pallas_call(
        _scores_kernel,
        out_shape=jax.ShapeDtypeStruct((M, k), jnp.float32),
        grid=(pl.cdiv(M, TM),),
        in_specs=[pl.BlockSpec((TM, K), lambda i: (i, 0)),
                  pl.BlockSpec((k, K), lambda i: (0, 0))],
        out_specs=pl.BlockSpec((TM, k), lambda i: (i, 0)),
        compiler_params=pltpu.CompilerParams(dimension_semantics=("parallel",)),
    )(x.astype(jnp.float32), a.astype(jnp.float32))


# ----------------------------------------------------------------------------
# Flash cross-attention + fused mk-MLP epilogue
#   re = softmax(q @ kv^T) @ kv + q    (kv is both K and V — same array)
#   logit = sigmoid( relu(re @ W1^T + b1) . w2 + b2 )
# ----------------------------------------------------------------------------
def _attn_mk_kernel(n_total, q_ref, kv_ref, w1t_ref, b1_ref, w2_ref, b2_ref,
                    logit_ref, m_sc, l_sc, acc_sc):
    nk = pl.program_id(2)
    tn = kv_ref.shape[1]
    ragged = (n_total % tn) != 0

    @pl.when(nk == 0)
    def _():
        m_sc[...] = jnp.full(m_sc.shape, -jnp.inf, jnp.float32)
        l_sc[...] = jnp.zeros(l_sc.shape, jnp.float32)
        acc_sc[...] = jnp.zeros(acc_sc.shape, jnp.float32)

    q = q_ref[0]                               # (TB, D)
    kv = kv_ref[0]                             # (TN, D)
    s = jax.lax.dot_general(
        q.astype(jnp.bfloat16), kv.astype(jnp.bfloat16),
        (((1,), (1,)), ((), ())),
        preferred_element_type=jnp.float32)    # (TB, TN)
    if ragged:
        col = nk * tn + jax.lax.broadcasted_iota(jnp.int32, s.shape, 1)
        s = jnp.where(col < n_total, s, -jnp.inf)
        kvrow = nk * tn + jax.lax.broadcasted_iota(jnp.int32, kv.shape, 0)
        kv = jnp.where(kvrow < n_total, kv, 0.0)

    m_prev = m_sc[...]
    m_new = jnp.maximum(m_prev, jnp.max(s, axis=-1, keepdims=True))
    alpha = jnp.exp(m_prev - m_new)
    p = jnp.exp(s - m_new)
    l_sc[...] = alpha * l_sc[...] + jnp.sum(p, axis=-1, keepdims=True)
    acc_sc[...] = alpha * acc_sc[...] + jnp.dot(
        p.astype(jnp.bfloat16), kv.astype(jnp.bfloat16),
        preferred_element_type=jnp.float32)
    m_sc[...] = m_new

    @pl.when(nk == pl.num_programs(2) - 1)
    def _():
        re = acc_sc[...] * pl.reciprocal(l_sc[...], approx=True) + q   # (TB, D)
        h = jnp.dot(re.astype(jnp.bfloat16), w1t_ref[...].astype(jnp.bfloat16),
                    preferred_element_type=jnp.float32) + b1_ref[...]
        h = jnp.maximum(h, 0.0)
        z = jnp.sum(h * w2_ref[...], axis=-1, keepdims=True) + b2_ref[...]
        logit_ref[0] = 1.0 / (1.0 + jnp.exp(-z))


def attn_mk(q3, kv3, w1t, b1, w2row, b2):
    C, B, D = q3.shape
    N = kv3.shape[1]
    H1 = w1t.shape[1]
    TB = _row_tile(B, cap=256)
    TN = _row_tile(N, cap=512)
    grid = (C, pl.cdiv(B, TB), pl.cdiv(N, TN))
    return pl.pallas_call(
        functools.partial(_attn_mk_kernel, N),
        out_shape=jax.ShapeDtypeStruct((C, B, 1), jnp.float32),
        grid=grid,
        in_specs=[
            pl.BlockSpec((1, TB, D), lambda c, b, n: (c, b, 0)),
            pl.BlockSpec((1, TN, D), lambda c, b, n: (c, n, 0)),
            pl.BlockSpec((D, H1), lambda c, b, n: (0, 0)),
            pl.BlockSpec((1, H1), lambda c, b, n: (0, 0)),
            pl.BlockSpec((1, H1), lambda c, b, n: (0, 0)),
            pl.BlockSpec((1, 1), lambda c, b, n: (0, 0)),
        ],
        out_specs=pl.BlockSpec((1, TB, 1), lambda c, b, n: (c, b, 0)),
        scratch_shapes=[pltpu.VMEM((TB, 1), jnp.float32),
                        pltpu.VMEM((TB, 1), jnp.float32),
                        pltpu.VMEM((TB, D), jnp.float32)],
        compiler_params=pltpu.CompilerParams(
            dimension_semantics=("parallel", "parallel", "arbitrary")),
    )(q3.astype(jnp.float32), kv3.astype(jnp.float32),
      w1t, b1, w2row, b2)


# ----------------------------------------------------------------------------
# Row-wise softmax, tiled over rows
# ----------------------------------------------------------------------------
def _softmax_kernel(x_ref, o_ref):
    x = x_ref[...]
    x = x - jnp.max(x, axis=-1, keepdims=True)
    e = jnp.exp(x)
    o_ref[...] = e / jnp.sum(e, axis=-1, keepdims=True)


def row_softmax(x):
    M, D = x.shape
    TM = _row_tile(M)
    return pl.pallas_call(
        _softmax_kernel,
        out_shape=jax.ShapeDtypeStruct((M, D), jnp.float32),
        grid=(pl.cdiv(M, TM),),
        in_specs=[pl.BlockSpec((TM, D), lambda i: (i, 0))],
        out_specs=pl.BlockSpec((TM, D), lambda i: (i, 0)),
        compiler_params=pltpu.CompilerParams(dimension_semantics=("parallel",)),
    )(x.astype(jnp.float32))


# ----------------------------------------------------------------------------
# Graph glue (segment softmax / spmm) — plain JAX
# ----------------------------------------------------------------------------
def segment_softmax(src, index, num_segments):
    seg_max = jax.ops.segment_max(src, index, num_segments=num_segments)
    e = jnp.exp(src - seg_max[index])
    seg_sum = jax.ops.segment_sum(e, index, num_segments=num_segments)
    return e / (seg_sum[index] + 1e-16)


def spmm(row, col, value, num_rows, mat):
    # out[row_e] += value_e * mat[col_e]
    return jax.ops.segment_sum(value[:, None] * mat[col], row,
                               num_segments=num_rows)


def gcn(x, edge_index):
    j, i = edge_index[0], edge_index[1]
    n = x.shape[0]
    deg = jax.ops.segment_sum(jnp.ones_like(i, dtype=x.dtype), i,
                              num_segments=n)
    dinv = deg ** -0.5
    norm = dinv[j] * dinv[i]
    return jax.nn.relu(spmm(i, j, norm, n, x))


def gat_e(p, x_e, edge_index, rel, num_rel):
    h, t = edge_index[0], edge_index[1]
    x_r_h, x_r_t, sc = gat_e_proj(x_e, p)
    e1 = sc[:, 0][h] + sc[:, 2][t]
    e2 = sc[:, 1][h] + sc[:, 3][t]
    alpha1 = segment_softmax(jax.nn.leaky_relu(e1), rel, num_rel)
    xrh = spmm(rel, h, alpha1, num_rel, x_r_h)
    alpha2 = segment_softmax(jax.nn.leaky_relu(e2), rel, num_rel)
    xrt = spmm(rel, t, alpha2, num_rel, x_r_t)
    return xrh + xrt


def gat_r(p, x_e, x_r, edge_index, rel, num_rel):
    h, t = edge_index[0], edge_index[1]
    e_h = row_scores(x_e, p["a_h"])[:, 0][h]
    e_r = row_scores(x_r, p["a_r"])[:, 0][rel]
    alpha = segment_softmax(jax.nn.leaky_relu(e_h + e_r), rel, num_rel)
    return spmm(rel, t, alpha, x_e.shape[0], x_e)


def gat(p, x, edge_index):
    j, i = edge_index[0], edge_index[1]
    sc = row_scores(x, p["aij"])                  # columns: [a_i, a_j]
    e = sc[:, 0][i] + sc[:, 1][j]
    alpha = segment_softmax(jax.nn.leaky_relu(e), i, x.shape[0])
    out = jax.nn.leaky_relu(spmm(i, j, alpha, x.shape[0], x))
    return out[:, :E_HIDDEN]


# ----------------------------------------------------------------------------
# AttentionNetwork: flash attention + fused mk epilogue, tiny channel softmax
# ----------------------------------------------------------------------------
def attention_network(p, x1, x_name1, onehot1, x2, x_name2, onehot2, data_batch):
    idx1 = data_batch[:, 0]
    idx2 = data_batch[:, 1]
    x1_train, x2_train = x1[idx1], x2[idx2]
    x1n, x2n = x_name1[idx1], x_name2[idx2]
    x1o, x2o = onehot1[idx1], onehot2[idx2]

    cat1 = jnp.stack([x1_train, x1n, x1o], 0)          # (3, B, 900)
    cat2 = jnp.stack([x2_train, x2n, x2o], 0)
    kv1 = jnp.stack([x2, x_name2, onehot2], 0)         # (3, N2, 900) (= K = V)
    kv2 = jnp.stack([x1, x_name1, onehot1], 0)

    log1 = attn_mk(cat1, kv1, p["mk_w1t"], p["mk_b1"], p["mk_w2row"], p["mk_b2"])
    log2 = attn_mk(cat2, kv2, p["mk_w1t"], p["mk_b1"], p["mk_w2row"], p["mk_b2"])
    fuse1 = jax.nn.softmax(log1[:, :, 0], axis=0)      # (3, B)
    fuse2 = jax.nn.softmax(log2[:, :, 0], axis=0)

    x_name1 = x_name1.at[idx1].set(x1n * fuse1[1][:, None])
    onehot1 = onehot1.at[idx1].set(x1o * fuse1[2][:, None])
    x_name2 = x_name2.at[idx2].set(x2n * fuse2[1][:, None])
    onehot2 = onehot2.at[idx2].set(x2o * fuse2[2][:, None])
    return x1, x_name1, onehot1, x2, x_name2, onehot2


# ----------------------------------------------------------------------------
# DSEA forward
# ----------------------------------------------------------------------------
def dsea_forward(params, x_e1, edge_index1, rel1, edge_index_all1, rel_all1,
                 x_name1, onehot1, x_e2, edge_index2, rel2, edge_index_all2,
                 rel_all2, x_name2, onehot2, data_batch, num_rel1, num_rel2):
    del rel_all1, rel_all2  # unused in the reference forward as well

    def branch(x_e, edge_index, rel, edge_index_all, x_name, onehot, num_rel):
        x_e = highway(params["hw1_wt"], x_e, gcn(x_e, edge_index_all))
        x_e = highway(params["hw2_wt"], x_e, gcn(x_e, edge_index_all))
        x_r = gat_e(params["gat_e"], x_e, edge_index, rel, num_rel)
        x_e = jnp.concatenate(
            [x_e, gat_r(params["gat_r"], x_e, x_r, edge_index, rel, num_rel)], 1)
        x_e = jnp.concatenate([x_e, gat(params["gat"], x_e, edge_index_all)], 1)

        lstm_in = x_name.reshape(-1, 3, E_HIDDEN)
        x_e = float(lstm_in.shape[1] ** 2) * x_e       # 3**layer == 9
        lstm_in = jnp.transpose(lstm_in, (1, 0, 2))    # (3, N, 300)
        out_a = bilstm(params["lstm1"], lstm_in)       # (3, N, 300)
        out_a = jnp.transpose(out_a, (1, 0, 2)).reshape(-1, DIM)

        lstm_in2 = jnp.transpose(onehot.reshape(-1, 3, E_HIDDEN), (1, 0, 2))
        out_b = unilstm(params["lstm2"], lstm_in2)     # (3, N, 300)
        out_b = jnp.transpose(out_b, (1, 0, 2)).reshape(-1, DIM)
        return x_e, out_a, out_b

    xe1, o1, o2 = branch(x_e1, edge_index1, rel1, edge_index_all1,
                         x_name1, onehot1, num_rel1)
    xe2, o3, o4 = branch(x_e2, edge_index2, rel2, edge_index_all2,
                         x_name2, onehot2, num_rel2)

    x1, xn1, oh1, x2, xn2, oh2 = attention_network(
        params["attn"], xe1, o1, o2, xe2, o3, o4, data_batch)

    xn1 = row_softmax(xn1)
    xn2 = row_softmax(xn2)
    oh1 = row_softmax(oh1)
    oh2 = row_softmax(oh2)
    return x1, xn1, oh1, x2, xn2, oh2


# ----------------------------------------------------------------------------
# Deterministic parameter init (weights stored pre-transposed for the kernels)
# ----------------------------------------------------------------------------
def init_params(key):
    ks = jax.random.split(key, 40)
    counter = iter(range(40))

    def w(shape, scale=0.05):
        return (scale * jax.random.normal(ks[next(counter)], shape)).astype(
            jnp.float32)

    def lstm_dir(inp, hid):
        w_ih = w((4 * hid, inp))
        w_hh = w((4 * hid, hid))
        b_ih = w((4 * hid,))
        b_hh = w((4 * hid,))
        return {
            "wih_t": jnp.transpose(w_ih),                                   # (inp, 4H)
            "b_ih": b_ih,
            "whh_t4": jnp.transpose(w_hh.reshape(4, hid, hid), (0, 2, 1)),  # (4,H,H)
            "bhh4": b_hh.reshape(4, 1, hid),
        }

    return {
        "hw1_wt": w((E_HIDDEN, E_HIDDEN)),                 # W^T layout (in, out)
        "hw2_wt": w((E_HIDDEN, E_HIDDEN)),
        "gat_e": {
            "wht": w((E_HIDDEN, R_HIDDEN)),                # W_h^T
            "wtt": w((E_HIDDEN, R_HIDDEN)),                # W_t^T
            "ah": w((2, R_HIDDEN)),                        # rows: a_h1, a_t1
            "at": w((2, R_HIDDEN)),                        # rows: a_h2, a_t2
        },
        "gat_r": {"a_h": w((1, E_HIDDEN)), "a_r": w((1, R_HIDDEN))},
        "gat": {"aij": w((2, 2 * E_HIDDEN))},              # rows: a_i, a_j
        "lstm1": {"fwd": lstm_dir(E_HIDDEN, 150), "bwd": lstm_dir(E_HIDDEN, 150)},
        "lstm2": lstm_dir(E_HIDDEN, E_HIDDEN),
        "attn": {
            "mk_w1t": w((DIM, DIM // 2)),                  # W1^T (900, 450)
            "mk_b1": w((1, DIM // 2)),
            "mk_w2row": w((1, DIM // 2)),                  # W2 row (1, 450)
            "mk_b2": w((1, 1)),
        },
    }


# ----------------------------------------------------------------------------
if __name__ == "__main__":
    key = jax.random.PRNGKey(0)
    pk, dk = jax.random.split(key)
    params = init_params(pk)

    N1, N2, B = 8, 8, 4
    dks = jax.random.split(dk, 6)
    x_e1 = 0.1 * jax.random.normal(dks[0], (N1, E_HIDDEN), jnp.float32)
    x_e2 = 0.1 * jax.random.normal(dks[1], (N2, E_HIDDEN), jnp.float32)
    x_name1 = 0.1 * jax.random.normal(dks[2], (N1, DIM), jnp.float32)
    x_name2 = 0.1 * jax.random.normal(dks[3], (N2, DIM), jnp.float32)
    onehot1 = 0.1 * jax.random.normal(dks[4], (N1, DIM), jnp.float32)
    onehot2 = 0.1 * jax.random.normal(dks[5], (N2, DIM), jnp.float32)

    ar = jnp.arange(8, dtype=jnp.int32)
    # edge_index layout: row 0 = source (j / head), row 1 = target (i / tail)
    src = jnp.concatenate([ar, ar])
    dst = jnp.concatenate([ar, (ar + 1) % 8])
    edge_index_all1 = jnp.stack([src, dst], 0)                 # (2, 16)
    edge_index_all2 = jnp.stack([src, (dst + 3) % 8], 0)       # (2, 16)
    rel_all1 = jnp.zeros((src.shape[0],), jnp.int32)
    rel_all2 = jnp.zeros((src.shape[0],), jnp.int32)

    h1 = jnp.array([0, 1, 2, 3, 4, 5, 6, 7], jnp.int32)
    t1 = jnp.array([1, 2, 3, 4, 5, 6, 7, 0], jnp.int32)
    rel1 = jnp.array([0, 1, 2, 0, 1, 2, 0, 1], jnp.int32)
    edge_index1 = jnp.stack([h1, t1], 0)                       # (2, 8)

    h2 = jnp.array([0, 2, 4, 6, 1, 3, 5, 7], jnp.int32)
    t2 = jnp.array([1, 3, 5, 7, 2, 4, 6, 0], jnp.int32)
    rel2 = jnp.array([0, 0, 1, 1, 2, 2, 0, 1], jnp.int32)
    edge_index2 = jnp.stack([h2, t2], 0)                       # (2, 8)

    data_batch = jnp.array([[0, 1], [2, 3], [4, 5], [6, 7]], jnp.int32)

    outs = dsea_forward(
        params, x_e1, edge_index1, rel1, edge_index_all1, rel_all1,
        x_name1, onehot1, x_e2, edge_index2, rel2, edge_index_all2,
        rel_all2, x_name2, onehot2, data_batch, num_rel1=3, num_rel2=3)
    jax.block_until_ready(outs)
    print("KERNEL_OK")
</pallas_src>

<mosaic_0001>
module attributes {stable_mosaic.version = 11 : i64} {
  func.func @_highway_kernel(%arg0: i32, %arg1: memref<8x300xf32, #tpu.memory_space<vmem>>, %arg2: memref<8x300xf32, #tpu.memory_space<vmem>>, %arg3: memref<300x300xf32, #tpu.memory_space<vmem>>, %arg4: memref<8x300xf32, #tpu.memory_space<vmem>>) attributes {dimension_semantics = [#tpu.dimension_semantics<parallel>], iteration_bounds = array<i64: 1>, scalar_prefetch = 0 : i64, scratch_operands = 0 : i64, tpu.core_type = #tpu.core_type<tc>, window_params = [{transform_indices = @transform_0, window_bounds = array<i64: 8, 300>}, {transform_indices = @transform_1, window_bounds = array<i64: 8, 300>}, {pipeline_mode = #tpu.pipeline_mode<synchronous>, transform_indices = @transform_2, window_bounds = array<i64: 300, 300>}, {transform_indices = @transform_3, window_bounds = array<i64: 8, 300>}]} {
    %c0 = arith.constant 0 : index
    %c0_0 = arith.constant 0 : index
    %0 = vector.load %arg1[%c0, %c0_0] : memref<8x300xf32, #tpu.memory_space<vmem>>, vector<8x300xf32>
    %1 = arith.truncf %0 : vector<8x300xf32> to vector<8x300xbf16>
    %c0_1 = arith.constant 0 : index
    %c0_2 = arith.constant 0 : index
    %2 = vector.load %arg3[%c0_1, %c0_2] : memref<300x300xf32, #tpu.memory_space<vmem>>, vector<300x300xf32>
    %3 = arith.truncf %2 : vector<300x300xf32> to vector<300x300xbf16>
    %cst = arith.constant dense<0.000000e+00> : vector<8x300xf32>
    %4 = tpu.matmul %1, %3, %cst {dimension_numbers = #tpu.dot_dimension_numbers<[1], [0], [0], [1], [0, 0, 1, 1], [], []>} : vector<8x300xbf16>, vector<300x300xbf16>, vector<8x300xf32> -> vector<8x300xf32>
    %cst_3 = arith.constant 9.99999993E-9 : f32
    %5 = vector.broadcast %cst_3 : f32 to vector<8x300xf32>
    %6 = arith.addf %4, %5 : vector<8x300xf32>
    %cst_4 = arith.constant 0.000000e+00 : f32
    %7 = vector.broadcast %cst_4 : f32 to vector<8x300xf32>
    %8 = arith.cmpf oge, %6, %7 : vector<8x300xf32>
    %cst_5 = arith.constant 0.00999999977 : f32
    %9 = vector.broadcast %cst_5 : f32 to vector<8x300xf32>
    %10 = arith.mulf %9, %6 : vector<8x300xf32>
    %11 = arith.select %8, %6, %10 : vector<8x300xi1>, vector<8x300xf32>
    %c0_6 = arith.constant 0 : index
    %c0_7 = arith.constant 0 : index
    %12 = vector.load %arg2[%c0_6, %c0_7] : memref<8x300xf32, #tpu.memory_space<vmem>>, vector<8x300xf32>
    %13 = arith.mulf %11, %12 : vector<8x300xf32>
    %cst_8 = arith.constant 1.000000e+00 : f32
    %14 = vector.broadcast %cst_8 : f32 to vector<8x300xf32>
    %15 = arith.subf %14, %11 : vector<8x300xf32>
    %16 = arith.mulf %15, %0 : vector<8x300xf32>
    %17 = arith.addf %13, %16 : vector<8x300xf32>
    %cst_9 = arith.constant 0.000000e+00 : f32
    %18 = vector.broadcast %cst_9 : f32 to vector<8x300xf32>
    %19 = arith.cmpf oge, %17, %18 : vector<8x300xf32>
    %cst_10 = arith.constant 0.00999999977 : f32
    %20 = vector.broadcast %cst_10 : f32 to vector<8x300xf32>
    %21 = arith.mulf %20, %17 : vector<8x300xf32>
    %22 = arith.select %19, %17, %21 : vector<8x300xi1>, vector<8x300xf32>
    %c0_11 = arith.constant 0 : index
    %c0_12 = arith.constant 0 : index
    %23 = vector.load %arg4[%c0_11, %c0_12] : memref<8x300xf32, #tpu.memory_space<vmem>>, vector<8x300xf32>
    tpu.vector_store %arg4[%c0_11, %c0_12], %22 {strides = array<i32>} : memref<8x300xf32, #tpu.memory_space<vmem>>, vector<8x300xf32>,
    return
  }
  func.func @transform_0(%arg0: i32) -> (i32, i32) {
    %c0_i32 = arith.constant 0 : i32
    %c0_i32_0 = arith.constant 0 : i32
    return %arg0, %c0_i32 : i32, i32
  }
  func.func @transform_1(%arg0: i32) -> (i32, i32) {
    %c0_i32 = arith.constant 0 : i32
    %c0_i32_0 = arith.constant 0 : i32
    return %arg0, %c0_i32 : i32, i32
  }
  func.func @transform_2(%arg0: i32) -> (i32, i32) {
    %c0_i32 = arith.constant 0 : i32
    %c0_i32_0 = arith.constant 0 : i32
    %c0_i32_1 = arith.constant 0 : i32
    return %c0_i32, %c0_i32_0 : i32, i32
  }
  func.func @transform_3(%arg0: i32) -> (i32, i32) {
    %c0_i32 = arith.constant 0 : i32
    %c0_i32_0 = arith.constant 0 : i32
    return %arg0, %c0_i32 : i32, i32
  }
}

</mosaic_0001>

<llo_original>
// kernel: tpu_custom_call.1
$region0: #{tpu_custom_call.1}
  #allocation0 [shape = 'u32[]', space=smem, size = 0x4, offset = 0x4, fixed_abs, tag = 'smem constant byte address 0x4 - core index']
  #allocation1 [shape = 'u32[72,128]{1,0:T(1,128)}', space=vmem, size = 0x9000, scoped, tag = 'internal scratch']
  %s0 = inlined_call_operand.hbm [shape: f32[8,300], index: 0, kind: input, shape index: {}]
  %s1 = inlined_call_operand.hbm [shape: f32[8,300], index: 1, kind: input, shape index: {}]
  %s2 = inlined_call_operand.hbm [shape: f32[300,300], index: 2, kind: input, shape index: {}]
  %s3 = inlined_call_operand.hbm [shape: f32[8,300], index: 3, kind: output, shape index: {}]
  %s4 = sld [smem:[#allocation0]]
  $region34: #{tpu_custom_call.1} parent=0
    _
  %s6 = ssub.s32 1, %s4
  %s7 = scalar_select 0, %s6, %s4
  $region1: #{tpu_custom_call.1} parent=0
    #allocation2 [shape = 'u8[12288]{0}', space=vmem, size = 0x3000, scoped, tag = 'input window, operand 0, single buffered']
    #allocation3 [shape = 's32[1]{0}', space=sflag, size = 0x4, scoped, tag = 'scoped memory for tpu_custom_call.1']
    #allocation4 [shape = 's32[1]{0}', space=sflag, size = 0x4, scoped, tag = 'scoped memory for tpu_custom_call.1']
    #allocation5 [shape = 'u8[12288]{0}', space=vmem, size = 0x3000, scoped, tag = 'input window, operand 1, single buffered']
    #allocation6 [shape = 's32[1]{0}', space=sflag, size = 0x4, scoped, tag = 'scoped memory for tpu_custom_call.1']
    #allocation7 [shape = 'u8[466944]{0}', space=vmem, size = 0x72000, scoped, tag = 'input window, operand 2, single buffered']
    #allocation8 [shape = 'u8[12288]{0}', space=vmem, size = 0x3000, scoped, tag = 'output window, operand 0, single buffered']
    %8 = vsyncpa [#allocation3], 0
    %9 = vsyncpa [#allocation6], 0
    %10 = vsyncpa [#allocation4], 0
    // Predicated region
    $region2: #{tpu_custom_call.1} parent=1 // pred_check
      _
    $region3: #{tpu_custom_call.1} parent=1 // pred_check_branch
      %12 = sbr.rel (0) target = $region5
    $region4: #{tpu_custom_call.1} parent=1 // pred_region
      %14 = vsyncadd [#allocation3], 0
      %s16 = sshll.u32 %s0, 4
      %s17 = int_to_ptr.hbm [resolvable:$true] %s16
      %s18 = sshll.u32 [#allocation2], 4
      %s19 = int_to_ptr.vmem [resolvable:$true] %s18
      %21 = dma.hbm_to_vmem [thread:$0]  %s17, 384, %s19, [#allocation3]
    $region5: #{tpu_custom_call.1} parent=1 // pred_fallthru
      _
    // Predicated region
    $region6: #{tpu_custom_call.1} parent=1 // pred_check
      _
    $region7: #{tpu_custom_call.1} parent=1 // pred_check_branch
      %23 = sbr.rel (0) target = $region9
    $region8: #{tpu_custom_call.1} parent=1 // pred_region
      %25 = vsyncadd [#allocation6], 0
      %s27 = sshll.u32 %s1, 4
      %s28 = int_to_ptr.hbm [resolvable:$true] %s27
      %s29 = sshll.u32 [#allocation5], 4
      %s30 = int_to_ptr.vmem [resolvable:$true] %s29
      %32 = dma.hbm_to_vmem [thread:$0]  %s28, 384, %s30, [#allocation6]
    $region9: #{tpu_custom_call.1} parent=1 // pred_fallthru
      _
    // Predicated region
    $region10: #{tpu_custom_call.1} parent=1 // pred_check
      _
    $region11: #{tpu_custom_call.1} parent=1 // pred_check_branch
      %34 = sbr.rel (0) target = $region13
    $region12: #{tpu_custom_call.1} parent=1 // pred_region
      %36 = vsyncadd [#allocation6], 0
      %s37 = sshll.u32 %s2, 4
      %s38 = int_to_ptr.hbm [resolvable:$true] %s37
      %s39 = sshll.u32 [#allocation7], 4
      %s40 = int_to_ptr.vmem [resolvable:$true] %s39
      %45 = dma.hbm_to_vmem [thread:$0]  %s38, 14592, %s40, [#allocation6], 384, 384, 24
    $region13: #{tpu_custom_call.1} parent=1 // pred_fallthru
      _
    // Predicated region
    $region14: #{tpu_custom_call.1} parent=1 // pred_check
      _
    $region15: #{tpu_custom_call.1} parent=1 // pred_check_branch
      %47 = sbr.rel (0) target = $region17
    $region16: #{tpu_custom_call.1} parent=1 // pred_region
      %49 = dma.done [#allocation3], 384
    $region17: #{tpu_custom_call.1} parent=1 // pred_fallthru
      _
    // Predicated region
    $region18: #{tpu_custom_call.1} parent=1 // pred_check
      _
    $region19: #{tpu_custom_call.1} parent=1 // pred_check_branch
      %51 = sbr.rel (0) target = $region21
    $region20: #{tpu_custom_call.1} parent=1 // pred_region
      %53 = dma.done [#allocation6], 384
    $region21: #{tpu_custom_call.1} parent=1 // pred_fallthru
      _
    // Predicated region
    $region22: #{tpu_custom_call.1} parent=1 // pred_check
      _
    $region23: #{tpu_custom_call.1} parent=1 // pred_check_branch
      %55 = sbr.rel (0) target = $region25
    $region24: #{tpu_custom_call.1} parent=1 // pred_region
      %57 = dma.done [#allocation6], 14592
    $region25: #{tpu_custom_call.1} parent=1 // pred_fallthru
      _
    %v59 = vld [vmem:[#allocation2] sm:$0xff]
    %v60 = vld [vmem:[#allocation2 + $0x8] sm:$0xff]
    %v61 = vld [vmem:[#allocation2 + $0x10] sm:$0xff]
    %v62 = vpack.c.bf16 %v59, %v59
    %v63 = vpack.c.bf16 %v60, %v60
    %v64 = vpack.c.bf16 %v61, %v61
    %v65 = vld [vmem:[#allocation7] sm:$0xff]
    %v66 = vld [vmem:[#allocation7 + $0x8] sm:$0xff]
    %v67 = vld [vmem:[#allocation7 + $0x10] sm:$0xff]
    %v68 = vld [vmem:[#allocation7 + $0x18] sm:$0xff]
    %v69 = vld [vmem:[#allocation7 + $0x20] sm:$0xff]
    %v70 = vld [vmem:[#allocation7 + $0x28] sm:$0xff]
    %v71 = vld [vmem:[#allocation7 + $0x30] sm:$0xff]
    %v72 = vld [vmem:[#allocation7 + $0x38] sm:$0xff]
    %v73 = vld [vmem:[#allocation7 + $0x40] sm:$0xff]
    %v74 = vld [vmem:[#allocation7 + $0x48] sm:$0xff]
    %v75 = vld [vmem:[#allocation7 + $0x50] sm:$0xff]
    %v76 = vld [vmem:[#allocation7 + $0x58] sm:$0xff]
    %v77 = vld [vmem:[#allocation7 + $0x60] sm:$0xff]
    %v78 = vld [vmem:[#allocation7 + $0x68] sm:$0xff]
    %v79 = vld [vmem:[#allocation7 + $0x70] sm:$0xff]
    %v80 = vld [vmem:[#allocation7 + $0x78] sm:$0xff]
    %v81 = vld [vmem:[#allocation7 + $0x80] sm:$0xff]
    %v82 = vld [vmem:[#allocation7 + $0x88] sm:$0xff]
    %v83 = vld [vmem:[#allocation7 + $0x90] sm:$0xff]
    %v84 = vld [vmem:[#allocation7 + $0x98] sm:$0xff]
    %v85 = vld [vmem:[#allocation7 + $0xa0] sm:$0xff]
    %v86 = vld [vmem:[#allocation7 + $0xa8] sm:$0xff]
    %v87 = vld [vmem:[#allocation7 + $0xb0] sm:$0xff]
    %v88 = vld [vmem:[#allocation7 + $0xb8] sm:$0xff]
    %v89 = vld [vmem:[#allocation7 + $0xc0] sm:$0xff]
    %v90 = vld [vmem:[#allocation7 + $0xc8] sm:$0xff]
    %v91 = vld [vmem:[#allocation7 + $0xd0] sm:$0xff]
    %v92 = vld [vmem:[#allocation7 + $0xd8] sm:$0xff]
    %v93 = vld [vmem:[#allocation7 + $0xe0] sm:$0xff]
    %v94 = vld [vmem:[#allocation7 + $0xe8] sm:$0xff]
    %v95 = vld [vmem:[#allocation7 + $0xf0] sm:$0xff]
    %v96 = vld [vmem:[#allocation7 + $0xf8] sm:$0xff]
    %v97 = vld [vmem:[#allocation7 + $0x100] sm:$0xff]
    %v98 = vld [vmem:[#allocation7 + $0x108] sm:$0xff]
    %v99 = vld [vmem:[#allocation7 + $0x110] sm:$0xff]
    %v100 = vld [vmem:[#allocation7 + $0x118] sm:$0xff]
    %v101 = vld [vmem:[#allocation7 + $0x120] sm:$0xff]
    %v102 = vld [vmem:[#allocation7 + $0x128] sm:$0xff]
    %v103 = vld [vmem:[#allocation7 + $0x130] sm:$0xff]
    %v104 = vld [vmem:[#allocation7 + $0x138] sm:$0xff]
    %v105 = vld [vmem:[#allocation7 + $0x140] sm:$0xff]
    %v106 = vld [vmem:[#allocation7 + $0x148] sm:$0xff]
    %v107 = vld [vmem:[#allocation7 + $0x150] sm:$0xff]
    %v108 = vld [vmem:[#allocation7 + $0x158] sm:$0xff]
    %v109 = vld [vmem:[#allocation7 + $0x160] sm:$0xff]
    %v110 = vld [vmem:[#allocation7 + $0x168] sm:$0xff]
    %v111 = vld [vmem:[#allocation7 + $0x170] sm:$0xff]
    %v112 = vld [vmem:[#allocation7 + $0x178] sm:$0xff]
    %v113 = vld [vmem:[#allocation7 + $0x180] sm:$0xff]
    %v114 = vld [vmem:[#allocation7 + $0x188] sm:$0xff]
    %v115 = vld [vmem:[#allocation7 + $0x190] sm:$0xff]
    %v116 = vld [vmem:[#allocation7 + $0x198] sm:$0xff]
    %v117 = vld [vmem:[#allocation7 + $0x1a0] sm:$0xff]
    %v118 = vld [vmem:[#allocation7 + $0x1a8] sm:$0xff]
    %v119 = vld [vmem:[#allocation7 + $0x1b0] sm:$0xff]
    %v120 = vld [vmem:[#allocation7 + $0x1b8] sm:$0xff]
    %v121 = vld [vmem:[#allocation7 + $0x1c0] sm:$0xff]
    %v122 = vld [vmem:[#allocation7 + $0x1c8] sm:$0xff]
    %v123 = vld [vmem:[#allocation7 + $0x1d0] sm:$0xff]
    %v124 = vld [vmem:[#allocation7 + $0x1d8] sm:$0xff]
    %v125 = vld [vmem:[#allocation7 + $0x1e0] sm:$0xff]
    %v126 = vld [vmem:[#allocation7 + $0x1e8] sm:$0xff]
    %v127 = vld [vmem:[#allocation7 + $0x1f0] sm:$0xff]
    %v128 = vld [vmem:[#allocation7 + $0x1f8] sm:$0xff]
    %v129 = vld [vmem:[#allocation7 + $0x200] sm:$0xff]
    %v130 = vld [vmem:[#allocation7 + $0x208] sm:$0xff]
    %v131 = vld [vmem:[#allocation7 + $0x210] sm:$0xff]
    %v132 = vld [vmem:[#allocation7 + $0x218] sm:$0xff]
    %v133 = vld [vmem:[#allocation7 + $0x220] sm:$0xff]
    %v134 = vld [vmem:[#allocation7 + $0x228] sm:$0xff]
    %v135 = vld [vmem:[#allocation7 + $0x230] sm:$0xff]
    %v136 = vld [vmem:[#allocation7 + $0x238] sm:$0xff]
    %v137 = vld [vmem:[#allocation7 + $0x240] sm:$0xff]
    %v138 = vld [vmem:[#allocation7 + $0x248] sm:$0xff]
    %v139 = vld [vmem:[#allocation7 + $0x250] sm:$0xff]
    %v140 = vld [vmem:[#allocation7 + $0x258] sm:$0xff]
    %v141 = vld [vmem:[#allocation7 + $0x260] sm:$0xff]
    %v142 = vld [vmem:[#allocation7 + $0x268] sm:$0xff]
    %v143 = vld [vmem:[#allocation7 + $0x270] sm:$0xff]
    %v144 = vld [vmem:[#allocation7 + $0x278] sm:$0xff]
    %v145 = vld [vmem:[#allocation7 + $0x280] sm:$0xff]
    %v146 = vld [vmem:[#allocation7 + $0x288] sm:$0xff]
    %v147 = vld [vmem:[#allocation7 + $0x290] sm:$0xff]
    %v148 = vld [vmem:[#allocation7 + $0x298] sm:$0xff]
    %v149 = vld [vmem:[#allocation7 + $0x2a0] sm:$0xff]
    %v150 = vld [vmem:[#allocation7 + $0x2a8] sm:$0xff]
    %v151 = vld [vmem:[#allocation7 + $0x2b0] sm:$0xff]
    %v152 = vld [vmem:[#allocation7 + $0x2b8] sm:$0xff]
    %v153 = vld [vmem:[#allocation7 + $0x2c0] sm:$0xff]
    %v154 = vld [vmem:[#allocation7 + $0x2c8] sm:$0xff]
    %v155 = vld [vmem:[#allocation7 + $0x2d0] sm:$0xff]
    %v156 = vld [vmem:[#allocation7 + $0x2d8] sm:$0xff]
    %v157 = vld [vmem:[#allocation7 + $0x2e0] sm:$0xff]
    %v158 = vld [vmem:[#allocation7 + $0x2e8] sm:$0xff]
    %v159 = vld [vmem:[#allocation7 + $0x2f0] sm:$0xff]
    %v160 = vld [vmem:[#allocation7 + $0x2f8] sm:$0xff]
    %v161 = vld [vmem:[#allocation7 + $0x300] sm:$0xff]
    %v162 = vld [vmem:[#allocation7 + $0x308] sm:$0xff]
    %v163 = vld [vmem:[#allocation7 + $0x310] sm:$0xff]
    %v164 = vld [vmem:[#allocation7 + $0x318] sm:$0xff]
    %v165 = vld [vmem:[#allocation7 + $0x320] sm:$0xff]
    %v166 = vld [vmem:[#allocation7 + $0x328] sm:$0xff]
    %v167 = vld [vmem:[#allocation7 + $0x330] sm:$0xff]
    %v168 = vld [vmem:[#allocation7 + $0x338] sm:$0xff]
    %v169 = vld [vmem:[#allocation7 + $0x340] sm:$0xff]
    %v170 = vld [vmem:[#allocation7 + $0x348] sm:$0xff]
    %v171 = vld [vmem:[#allocation7 + $0x350] sm:$0xff]
    %v172 = vld [vmem:[#allocation7 + $0x358] sm:$0xff]
    %v173 = vld [vmem:[#allocation7 + $0x360] sm:$0xff]
    %v174 = vld [vmem:[#allocation7 + $0x368] sm:$0xff]
    %v175 = vld [vmem:[#allocation7 + $0x370] sm:$0xff]
    %v176 = vld [vmem:[#allocation7 + $0x378] sm:$0xf]
    %v177 = vld [vmem:[#allocation7 + $0x380] sm:$0xf]
    %v178 = vld [vmem:[#allocation7 + $0x388] sm:$0xf]
    %v179 = vpack.c.bf16 %v68, %v65
    %v180 = vpack.c.bf16 %v69, %v66
    %v181 = vpack.c.bf16 %v70, %v67
    %v182 = vpack.c.bf16 %v74, %v71
    %v183 = vpack.c.bf16 %v75, %v72
    %v184 = vpack.c.bf16 %v76, %v73
    %v185 = vpack.c.bf16 %v80, %v77
    %v186 = vpack.c.bf16 %v81, %v78
    %v187 = vpack.c.bf16 %v82, %v79
    %v188 = vpack.c.bf16 %v86, %v83
    %v189 = vpack.c.bf16 %v87, %v84
    %v190 = vpack.c.bf16 %v88, %v85
    %v191 = vpack.c.bf16 %v92, %v89
    %v192 = vpack.c.bf16 %v93, %v90
    %v193 = vpack.c.bf16 %v94, %v91
    %v194 = vpack.c.bf16 %v98, %v95
    %v195 = vpack.c.bf16 %v99, %v96
    %v196 = vpack.c.bf16 %v100, %v97
    %v197 = vpack.c.bf16 %v104, %v101
    %v198 = vpack.c.bf16 %v105, %v102
    %v199 = vpack.c.bf16 %v106, %v103
    %v200 = vpack.c.bf16 %v110, %v107
    %v201 = vpack.c.bf16 %v111, %v108
    %v202 = vpack.c.bf16 %v112, %v109
    %v203 = vpack.c.bf16 %v116, %v113
    %v204 = vpack.c.bf16 %v117, %v114
    %v205 = vpack.c.bf16 %v118, %v115
    %v206 = vpack.c.bf16 %v122, %v119
    %v207 = vpack.c.bf16 %v123, %v120
    %v208 = vpack.c.bf16 %v124, %v121
    %v209 = vpack.c.bf16 %v128, %v125
    %v210 = vpack.c.bf16 %v129, %v126
    %v211 = vpack.c.bf16 %v130, %v127
    %v212 = vpack.c.bf16 %v134, %v131
    %v213 = vpack.c.bf16 %v135, %v132
    %v214 = vpack.c.bf16 %v136, %v133
    %v215 = vpack.c.bf16 %v140, %v137
    %v216 = vpack.c.bf16 %v141, %v138
    %v217 = vpack.c.bf16 %v142, %v139
    %v218 = vpack.c.bf16 %v146, %v143
    %v219 = vpack.c.bf16 %v147, %v144
    %v220 = vpack.c.bf16 %v148, %v145
    %v221 = vpack.c.bf16 %v152, %v149
    %v222 = vpack.c.bf16 %v153, %v150
    %v223 = vpack.c.bf16 %v154, %v151
    %v224 = vpack.c.bf16 %v158, %v155
    %v225 = vpack.c.bf16 %v159, %v156
    %v226 = vpack.c.bf16 %v160, %v157
    %v227 = vpack.c.bf16 %v164, %v161
    %v228 = vpack.c.bf16 %v165, %v162
    %v229 = vpack.c.bf16 %v166, %v163
    %v230 = vpack.c.bf16 %v170, %v167
    %v231 = vpack.c.bf16 %v171, %v168
    %v232 = vpack.c.bf16 %v172, %v169
    %v233 = vpack.c.bf16 %v176, %v173
    %v234 = vpack.c.bf16 %v177, %v174
    %v235 = vpack.c.bf16 %v178, %v175
    %vm236 = vcmask 359424
    %v238 = vsel %vm236, %v64, 0
    %vm240 = vcmask 1045504
    %v242 = vsel %vm240, %v233, 0
    %v245 = vsel %vm240, %v234, 0
    %v248 = vsel %vm240, %v235, 0
    %250 = vmatpush.bf16.msra.mxu0 %v200
    %251 = vmatpush.bf16.msra.mxu0 %v197
    %252 = vmatpush.bf16.msra.mxu0 %v194
    %253 = vmatpush.bf16.msra.mxu0 %v191
    %254 = vmatpush.bf16.msra.mxu0 %v188
    %255 = vmatpush.bf16.msra.mxu0 %v185
    %256 = vmatpush.bf16.msra.mxu0 %v182
    %257 = vmatpush.bf16.msra.mxu0 %v179
    %258 = vmatmul.bf16.gmra.mxu0 %v62
    %v259 = vpop.f32.mrf.mxu0
    %v260 = vadd.f32 1e-08, %v259
    %v261 = vpop.f32.mrf.mxu0
    %262 = vdwg.mxu0
    %263 = vmatpush.bf16.msra.mxu0 %v224
    %264 = vmatpush.bf16.msra.mxu0 %v221
    %265 = vmatpush.bf16.msra.mxu0 %v218
    %266 = vmatpush.bf16.msra.mxu0 %v215
    %267 = vmatpush.bf16.msra.mxu0 %v212
    %268 = vmatpush.bf16.msra.mxu0 %v209
    %269 = vmatpush.bf16.msra.mxu0 %v206
    %270 = vmatpush.bf16.msra.mxu0 %v203
    %271 = vmatmul.bf16.gmra.mxu0 %v63
    %v272 = vpop.f32.mrf.mxu0
    %v273 = vadd.f32 %v260, %v272
    %v274 = vpop.f32.mrf.mxu0
    %275 = vdwg.mxu0
    %276 = vmatpush.bf16.msra.mxu0 0
    %277 = vmatpush.bf16.msra.mxu0 0
    %278 = vmatpush.bf16.msra.mxu0 0
    %279 = vmatpush.bf16.msra.mxu0 0
    %280 = vmatpush.bf16.msra.mxu0 0
    %281 = vmatpush.bf16.msra.mxu0 %v242
    %282 = vmatpush.bf16.msra.mxu0 %v230
    %283 = vmatpush.bf16.msra.mxu0 %v227
    %284 = vmatmul.bf16.gmra.mxu0 %v238
    %v285 = vpop.f32.mrf.mxu0
    %v286 = vadd.f32 %v273, %v285
    %v287 = vpop.f32.mrf.mxu0
    %288 = vdwg.mxu0
    %289 = vmatpush.bf16.msra.mxu0 %v201
    %290 = vmatpush.bf16.msra.mxu0 %v198
    %291 = vmatpush.bf16.msra.mxu0 %v195
    %292 = vmatpush.bf16.msra.mxu0 %v192
    %293 = vmatpush.bf16.msra.mxu0 %v189
    %294 = vmatpush.bf16.msra.mxu0 %v186
    %295 = vmatpush.bf16.msra.mxu0 %v183
    %296 = vmatpush.bf16.msra.mxu0 %v180
    %297 = vmatmul.bf16.gmra.mxu0 %v62
    %v298 = vpop.f32.mrf.mxu0
    %v299 = vadd.f32 1e-08, %v298
    %v300 = vpop.f32.mrf.mxu0
    %301 = vdwg.mxu0
    %302 = vmatpush.bf16.msra.mxu0 %v225
    %303 = vmatpush.bf16.msra.mxu0 %v222
    %304 = vmatpush.bf16.msra.mxu0 %v219
    %305 = vmatpush.bf16.msra.mxu0 %v216
    %306 = vmatpush.bf16.msra.mxu0 %v213
    %307 = vmatpush.bf16.msra.mxu0 %v210
    %308 = vmatpush.bf16.msra.mxu0 %v207
    %309 = vmatpush.bf16.msra.mxu0 %v204
    %310 = vmatmul.bf16.gmra.mxu0 %v63
    %v311 = vpop.f32.mrf.mxu0
    %v312 = vadd.f32 %v299, %v311
    %v313 = vpop.f32.mrf.mxu0
    %314 = vdwg.mxu0
    %315 = vmatpush.bf16.msra.mxu0 0
    %316 = vmatpush.bf16.msra.mxu0 0
    %317 = vmatpush.bf16.msra.mxu0 0
    %318 = vmatpush.bf16.msra.mxu0 0
    %319 = vmatpush.bf16.msra.mxu0 0
    %320 = vmatpush.bf16.msra.mxu0 %v245
    %321 = vmatpush.bf16.msra.mxu0 %v231
    %322 = vmatpush.bf16.msra.mxu0 %v228
    %323 = vmatmul.bf16.gmra.mxu0 %v238
    %v324 = vpop.f32.mrf.mxu0
    %v325 = vadd.f32 %v312, %v324
    %v326 = vpop.f32.mrf.mxu0
    %327 = vdwg.mxu0
    %328 = vmatpush.bf16.msra.mxu0 %v202
    %329 = vmatpush.bf16.msra.mxu0 %v199
    %330 = vmatpush.bf16.msra.mxu0 %v196
    %331 = vmatpush.bf16.msra.mxu0 %v193
    %332 = vmatpush.bf16.msra.mxu0 %v190
    %333 = vmatpush.bf16.msra.mxu0 %v187
    %334 = vmatpush.bf16.msra.mxu0 %v184
    %335 = vmatpush.bf16.msra.mxu0 %v181
    %336 = vmatmul.bf16.gmra.mxu0 %v62
    %v337 = vpop.f32.mrf.mxu0
    %v338 = vadd.f32 1e-08, %v337
    %v339 = vpop.f32.mrf.mxu0
    %340 = vdwg.mxu0
    %341 = vmatpush.bf16.msra.mxu0 %v226
    %342 = vmatpush.bf16.msra.mxu0 %v223
    %343 = vmatpush.bf16.msra.mxu0 %v220
    %344 = vmatpush.bf16.msra.mxu0 %v217
    %345 = vmatpush.bf16.msra.mxu0 %v214
    %346 = vmatpush.bf16.msra.mxu0 %v211
    %347 = vmatpush.bf16.msra.mxu0 %v208
    %348 = vmatpush.bf16.msra.mxu0 %v205
    %349 = vmatmul.bf16.gmra.mxu0 %v63
    %v350 = vpop.f32.mrf.mxu0
    %v351 = vadd.f32 %v338, %v350
    %v352 = vpop.f32.mrf.mxu0
    %353 = vdwg.mxu0
    %354 = vmatpush.bf16.msra.mxu0 0
    %355 = vmatpush.bf16.msra.mxu0 0
    %356 = vmatpush.bf16.msra.mxu0 0
    %357 = vmatpush.bf16.msra.mxu0 0
    %358 = vmatpush.bf16.msra.mxu0 0
    %359 = vmatpush.bf16.msra.mxu0 %v248
    %360 = vmatpush.bf16.msra.mxu0 %v232
    %361 = vmatpush.bf16.msra.mxu0 %v229
    %362 = vmatmul.bf16.gmra.mxu0 %v238
    %v363 = vpop.f32.mrf.mxu0
    %v364 = vadd.f32 %v351, %v363
    %v365 = vpop.f32.mrf.mxu0
    %366 = vdwg.mxu0
    %vm367 = vcmp.ge.f32.partialorder %v286, 0.0
    %vm368 = vcmp.ge.f32.partialorder %v325, 0.0
    %vm369 = vcmp.ge.f32.partialorder %v364, 0.0
    %v370 = vmul.f32 %v286, 0.01
    %v371 = vmul.f32 %v325, 0.01
    %v372 = vmul.f32 %v364, 0.01
    %v373 = vsel %vm367, %v286, %v370
    %v374 = vsel %vm368, %v325, %v371
    %v375 = vsel %vm369, %v364, %v372
    %v376 = vld [vmem:[#allocation5] sm:$0xff]
    %v377 = vld [vmem:[#allocation5 + $0x8] sm:$0xff]
    %v378 = vld [vmem:[#allocation5 + $0x10] sm:$0xff]
    %v379 = vmul.f32 %v373, %v376
    %v380 = vmul.f32 %v374, %v377
    %v381 = vmul.f32 %v375, %v378
    %v382 = vsub.f32 1.0, %v373
    %v383 = vsub.f32 1.0, %v374
    %v384 = vsub.f32 1.0, %v375
    %v385 = vmul.f32 %v382, %v59
    %v386 = vmul.f32 %v383, %v60
    %v387 = vmul.f32 %v384, %v61
    %v388 = vadd.f32 %v379, %v385
    %v389 = vadd.f32 %v380, %v386
    %v390 = vadd.f32 %v381, %v387
    %vm391 = vcmp.ge.f32.partialorder %v388, 0.0
    %vm392 = vcmp.ge.f32.partialorder %v389, 0.0
    %vm393 = vcmp.ge.f32.partialorder %v390, 0.0
    %v394 = vmul.f32 %v388, 0.01
    %v395 = vmul.f32 %v389, 0.01
    %v396 = vmul.f32 %v390, 0.01
    %v397 = vsel %vm391, %v388, %v394
    %v398 = vsel %vm392, %v389, %v395
    %v399 = vsel %vm393, %v390, %v396
    %400 = vst [vmem:[#allocation8] sm:$0xff] %v397
    %401 = vst [vmem:[#allocation8 + $0x8] sm:$0xff] %v398
    %402 = vst.msk [vmem:[#allocation8 + $0x10] sm:$0xff] %vm236, %v399
    // Predicated region
    $region26: #{tpu_custom_call.1} parent=1 // pred_check
      _
    $region27: #{tpu_custom_call.1} parent=1 // pred_check_branch
      %404 = sbr.rel (0) target = $region29
    $region28: #{tpu_custom_call.1} parent=1 // pred_region
      %406 = vsyncadd [#allocation4], 0
      %s408 = sshll.u32 [#allocation8], 4
      %s409 = int_to_ptr.vmem [resolvable:$true] %s408
      %s410 = sshll.u32 %s3, 4
      %s411 = int_to_ptr.hbm [resolvable:$true] %s410
      %413 = dma.vmem_to_hbm [thread:$0]  %s409, 384, %s411, [#allocation4]
    $region29: #{tpu_custom_call.1} parent=1 // pred_fallthru
      _
    // Predicated region
    $region30: #{tpu_custom_call.1} parent=1 // pred_check
      _
    $region31: #{tpu_custom_call.1} parent=1 // pred_check_branch
      %415 = sbr.rel (0) target = $region33
    $region32: #{tpu_custom_call.1} parent=1 // pred_region
      %417 = dma.done [#allocation4], 384
    $region33: #{tpu_custom_call.1} parent=1 // pred_fallthru
      _
    %418 = vsyncpa [#allocation3], 1
    %419 = vsyncpa [#allocation6], 1
    %420 = vsyncpa [#allocation4], 1

</llo_original>
